<compile_context>
chip_gen: v7x
topology: tpu7x:2x2x1
jax: 0.10.0
libtpu: 0.0.40
codegen_flags: <defaults>
</compile_context>

<pallas_src>
import math
import functools

import jax
import jax.numpy as jnp
from jax.experimental import pallas as pl
from jax.experimental.pallas import tpu as pltpu


# --------------------------------------------------------------------------- #
# Kernels
# --------------------------------------------------------------------------- #
def _support_kernel(x_ref, w_ref, out_ref):
    # support = x @ W  -> (nstock, nhid), computed once (hoisted out of the row grid).
    out_ref[...] = jnp.dot(
        x_ref[...], w_ref[...], preferred_element_type=jnp.float32
    )


def _gcn_row_kernel(wrel_ref, adj_ref, support_ref, bias_ref, out_ref, *,
                    apply_relation):
    # adj_ref     : (nrel, tm, nstock)  -- lane-dense along nstock
    # wrel_ref    : (nrel,) in SMEM     -- scalar reads
    # support_ref : (nstock, nhid)      -- VMEM-resident across the row grid
    # bias_ref    : (1, nhid)
    # out_ref     : (tm, nhid)
    nrel = adj_ref.shape[0]
    if apply_relation:
        # Unrolled relation contraction: sum_r w_rel[r] * adj[r]  (pure VPU).
        adj2 = wrel_ref[0] * adj_ref[0]
        for r in range(1, nrel):
            adj2 = adj2 + wrel_ref[r] * adj_ref[r]
    else:
        # n_relation == 1: the module skips the w_relation contraction entirely.
        adj2 = adj_ref[0]

    out = jnp.dot(adj2, support_ref[...], preferred_element_type=jnp.float32)
    out_ref[...] = (out + bias_ref[...]).astype(out_ref.dtype)


# --------------------------------------------------------------------------- #
# Wrapper
# --------------------------------------------------------------------------- #
def _pick_row_tile(nstock, nrel, itemsize=4, adj_budget_bytes=16 * 1024 * 1024):
    """Largest row tile so that 2 pipeline buffers of the adj tile fit the budget
    (budget is conservative enough for v7x's 64 MiB VMEM with headroom)."""
    if nstock <= 8:
        return nstock
    row_bytes = nstock * nrel * itemsize
    tm = adj_budget_bytes // (2 * row_bytes)
    tm = min(max(8, (tm // 8) * 8), nstock)
    return int(tm)


@functools.partial(jax.jit, static_argnames=("tm",))
def gcn_forward(x, adj, weight, w_relation, bias=None, tm=None):
    nstock, _nfeat = x.shape
    nhid = weight.shape[1]
    nrelations = w_relation.shape[0]

    if bias is None:
        bias = jnp.zeros((nhid,), jnp.float32)
    bias_b = bias.reshape(1, nhid).astype(jnp.float32)

    vmem_full = lambda: pl.BlockSpec(memory_space=pltpu.MemorySpace.VMEM)

    # ---- support = x @ W (once, tiny single-block kernel) -------------------
    support = pl.pallas_call(
        _support_kernel,
        out_shape=jax.ShapeDtypeStruct((nstock, nhid), jnp.float32),
        in_specs=[vmem_full(), vmem_full()],
        out_specs=vmem_full(),
    )(x, weight)

    # ---- adj layout plumbing: nrel-major so nstock is the lane axis ---------
    apply_relation = nrelations != 1
    if adj.ndim == 2:
        adj_t = adj[None, :, :]          # (1, nstock, nstock)
        apply_relation = False
    else:
        adj_t = jnp.transpose(adj, (2, 0, 1))   # (nrel, nstock, nstock)
    nrel = adj_t.shape[0]

    if tm is None:
        tm = _pick_row_tile(nstock, nrel, adj_t.dtype.itemsize)
    grid = (pl.cdiv(nstock, tm),)

    kernel = functools.partial(_gcn_row_kernel, apply_relation=apply_relation)

    return pl.pallas_call(
        kernel,
        out_shape=jax.ShapeDtypeStruct((nstock, nhid), jnp.float32),
        grid=grid,
        in_specs=[
            # w_relation: tiny scalar table in SMEM (no VMEM broadcast operand).
            pl.BlockSpec(memory_space=pltpu.MemorySpace.SMEM),
            # adj: row-tiled, full columns (lane-dense), all relations per tile.
            pl.BlockSpec((nrel, tm, nstock), lambda i: (0, i, 0)),
            # support: full array, same block every step -> stays VMEM-resident.
            pl.BlockSpec((nstock, nhid), lambda i: (0, 0)),
            # bias: full array, resident.
            pl.BlockSpec((1, nhid), lambda i: (0, 0)),
        ],
        out_specs=pl.BlockSpec((tm, nhid), lambda i: (i, 0)),
        compiler_params=pltpu.CompilerParams(
            dimension_semantics=("parallel",),       # shard rows across TCs on v7x
            vmem_limit_bytes=32 * 1024 * 1024,       # above scoped default, safe on all gens
        ),
    )(w_relation.astype(jnp.float32), adj_t, support, bias_b)


# --------------------------------------------------------------------------- #
# Parameter init (deterministic re-implementation of reset_parameters())
# --------------------------------------------------------------------------- #
def _init_params(key, nrelations, in_features, out_features):
    stdv = 1.0 / math.sqrt(out_features)
    k_w, k_b, k_r = jax.random.split(key, 3)
    weight = jax.random.uniform(
        k_w, (in_features, out_features), jnp.float32, -stdv, stdv
    )
    bias = jax.random.uniform(k_b, (out_features,), jnp.float32, -stdv, stdv)
    w_relation = jax.random.uniform(
        k_r, (nrelations,), jnp.float32, -stdv, stdv
    )
    return weight, w_relation, bias


if __name__ == "__main__":
    # Small shapes consistent with the module's forward.
    nstock, nfeat, nhid, nrel = 32, 16, 32, 4

    key = jax.random.PRNGKey(0)
    k_x, k_adj, k_p, k_adj2 = jax.random.split(key, 4)

    x = jax.random.normal(k_x, (nstock, nfeat), jnp.float32)
    adj3 = jax.random.normal(k_adj, (nstock, nstock, nrel), jnp.float32)
    weight, w_relation, bias = _init_params(k_p, nrel, nfeat, nhid)

    # Multi-relation path, forcing a 4-step row grid (tm=8) to exercise tiling.
    out = gcn_forward(x, adj3, weight, w_relation, bias, tm=8)
    out = jax.block_until_ready(out)

    # Pure-JAX reference (same contraction structure, f32 accumulate).
    support_ref = jnp.dot(x, weight, preferred_element_type=jnp.float32)
    adj2_ref = jnp.sum(adj3 * w_relation[None, None, :], axis=-1)
    ref = jnp.dot(adj2_ref, support_ref, preferred_element_type=jnp.float32) + bias
    assert out.shape == (nstock, nhid)
    assert jnp.allclose(out, ref, atol=1e-3, rtol=1e-3), "nrel=4 path mismatch"

    # n_relation == 1 path: adj already 2-D, no w_relation contraction.
    adj2d = jax.random.normal(k_adj2, (nstock, nstock), jnp.float32)
    w1, wr1, b1 = _init_params(k_p, 1, nfeat, nhid)
    out1 = jax.block_until_ready(gcn_forward(x, adj2d, w1, wr1, b1))
    ref1 = jnp.dot(
        adj2d, jnp.dot(x, w1, preferred_element_type=jnp.float32),
        preferred_element_type=jnp.float32,
    ) + b1
    assert jnp.allclose(out1, ref1, atol=1e-3, rtol=1e-3), "nrel=1 path mismatch"

    print("KERNEL_OK")
</pallas_src>

<mosaic_0001>
module attributes {stable_mosaic.version = 11 : i64} {
  func.func @_gcn_row_kernel(%arg0: i32, %arg1: memref<4xf32, #tpu.memory_space<smem>>, %arg2: memref<4x8x32xf32, #tpu.memory_space<vmem>>, %arg3: memref<32x32xf32, #tpu.memory_space<vmem>>, %arg4: memref<1x32xf32, #tpu.memory_space<vmem>>, %arg5: memref<8x32xf32, #tpu.memory_space<vmem>>) attributes {dimension_semantics = [#tpu.dimension_semantics<parallel>], iteration_bounds = array<i64: 4>, scalar_prefetch = 0 : i64, scratch_operands = 0 : i64, tpu.core_type = #tpu.core_type<tc>, window_params = [{transform_indices = @transform_0, window_bounds = array<i64: 4>}, {transform_indices = @transform_1, window_bounds = array<i64: 4, 8, 32>}, {pipeline_mode = #tpu.pipeline_mode<synchronous>, transform_indices = @transform_2, window_bounds = array<i64: 32, 32>}, {pipeline_mode = #tpu.pipeline_mode<synchronous>, transform_indices = @transform_3, window_bounds = array<i64: 1, 32>}, {transform_indices = @transform_4, window_bounds = array<i64: 8, 32>}]} {
    %c0 = arith.constant 0 : index
    %0 = memref.load %arg1[%c0] : memref<4xf32, #tpu.memory_space<smem>>
    %c0_0 = arith.constant 0 : index
    %c0_1 = arith.constant 0 : index
    %c0_2 = arith.constant 0 : index
    %1 = vector.load %arg2[%c0_0, %c0_1, %c0_2] : memref<4x8x32xf32, #tpu.memory_space<vmem>>, vector<1x8x32xf32>
    %2 = vector.shape_cast %1 : vector<1x8x32xf32> to vector<8x32xf32>
    %3 = vector.broadcast %0 : f32 to vector<8x32xf32>
    %4 = arith.mulf %3, %2 : vector<8x32xf32>
    %c1 = arith.constant 1 : index
    %5 = memref.load %arg1[%c1] : memref<4xf32, #tpu.memory_space<smem>>
    %c1_3 = arith.constant 1 : index
    %c0_4 = arith.constant 0 : index
    %c0_5 = arith.constant 0 : index
    %6 = vector.load %arg2[%c1_3, %c0_4, %c0_5] : memref<4x8x32xf32, #tpu.memory_space<vmem>>, vector<1x8x32xf32>
    %7 = vector.shape_cast %6 : vector<1x8x32xf32> to vector<8x32xf32>
    %8 = vector.broadcast %5 : f32 to vector<8x32xf32>
    %9 = arith.mulf %8, %7 : vector<8x32xf32>
    %10 = arith.addf %4, %9 : vector<8x32xf32>
    %c2 = arith.constant 2 : index
    %11 = memref.load %arg1[%c2] : memref<4xf32, #tpu.memory_space<smem>>
    %c2_6 = arith.constant 2 : index
    %c0_7 = arith.constant 0 : index
    %c0_8 = arith.constant 0 : index
    %12 = vector.load %arg2[%c2_6, %c0_7, %c0_8] : memref<4x8x32xf32, #tpu.memory_space<vmem>>, vector<1x8x32xf32>
    %13 = vector.shape_cast %12 : vector<1x8x32xf32> to vector<8x32xf32>
    %14 = vector.broadcast %11 : f32 to vector<8x32xf32>
    %15 = arith.mulf %14, %13 : vector<8x32xf32>
    %16 = arith.addf %10, %15 : vector<8x32xf32>
    %c3 = arith.constant 3 : index
    %17 = memref.load %arg1[%c3] : memref<4xf32, #tpu.memory_space<smem>>
    %c3_9 = arith.constant 3 : index
    %c0_10 = arith.constant 0 : index
    %c0_11 = arith.constant 0 : index
    %18 = vector.load %arg2[%c3_9, %c0_10, %c0_11] : memref<4x8x32xf32, #tpu.memory_space<vmem>>, vector<1x8x32xf32>
    %19 = vector.shape_cast %18 : vector<1x8x32xf32> to vector<8x32xf32>
    %20 = vector.broadcast %17 : f32 to vector<8x32xf32>
    %21 = arith.mulf %20, %19 : vector<8x32xf32>
    %22 = arith.addf %16, %21 : vector<8x32xf32>
    %c0_12 = arith.constant 0 : index
    %c0_13 = arith.constant 0 : index
    %23 = vector.load %arg3[%c0_12, %c0_13] : memref<32x32xf32, #tpu.memory_space<vmem>>, vector<32x32xf32>
    %cst = arith.constant dense<0.000000e+00> : vector<8x32xf32>
    %24 = tpu.matmul %22, %23, %cst {dimension_numbers = #tpu.dot_dimension_numbers<[1], [0], [0], [1], [0, 0, 1, 1], [], []>} : vector<8x32xf32>, vector<32x32xf32>, vector<8x32xf32> -> vector<8x32xf32>
    %c0_14 = arith.constant 0 : index
    %c0_15 = arith.constant 0 : index
    %25 = vector.load %arg4[%c0_14, %c0_15] : memref<1x32xf32, #tpu.memory_space<vmem>>, vector<1x32xf32>
    %26 = vector.broadcast %25 : vector<1x32xf32> to vector<8x32xf32>
    %27 = arith.addf %24, %26 : vector<8x32xf32>
    %c0_16 = arith.constant 0 : index
    %c0_17 = arith.constant 0 : index
    %28 = vector.load %arg5[%c0_16, %c0_17] : memref<8x32xf32, #tpu.memory_space<vmem>>, vector<8x32xf32>
    tpu.vector_store %arg5[%c0_16, %c0_17], %27 {strides = array<i32>} : memref<8x32xf32, #tpu.memory_space<vmem>>, vector<8x32xf32>,
    return
  }
  func.func @transform_0(%arg0: i32) -> i32 {
    %c0_i32 = arith.constant 0 : i32
    %c0_i32_0 = arith.constant 0 : i32
    return %c0_i32 : i32
  }
  func.func @transform_1(%arg0: i32) -> (i32, i32, i32) {
    %c0_i32 = arith.constant 0 : i32
    %c0_i32_0 = arith.constant 0 : i32
    %c0_i32_1 = arith.constant 0 : i32
    return %c0_i32, %arg0, %c0_i32_0 : i32, i32, i32
  }
  func.func @transform_2(%arg0: i32) -> (i32, i32) {
    %c0_i32 = arith.constant 0 : i32
    %c0_i32_0 = arith.constant 0 : i32
    %c0_i32_1 = arith.constant 0 : i32
    return %c0_i32, %c0_i32_0 : i32, i32
  }
  func.func @transform_3(%arg0: i32) -> (i32, i32) {
    %c0_i32 = arith.constant 0 : i32
    %c0_i32_0 = arith.constant 0 : i32
    %c0_i32_1 = arith.constant 0 : i32
    return %c0_i32, %c0_i32_0 : i32, i32
  }
  func.func @transform_4(%arg0: i32) -> (i32, i32) {
    %c0_i32 = arith.constant 0 : i32
    %c0_i32_0 = arith.constant 0 : i32
    return %arg0, %c0_i32 : i32, i32
  }
}

module attributes {stable_mosaic.version = 11 : i64} {
  func.func @_support_kernel(%arg0: memref<32x16xf32, #tpu.memory_space<vmem>>, %arg1: memref<16x32xf32, #tpu.memory_space<vmem>>, %arg2: memref<32x32xf32, #tpu.memory_space<vmem>>) attributes {dimension_semantics = [], scalar_prefetch = 0 : i64, scratch_operands = 0 : i64, tpu.core_type = #tpu.core_type<tc>} {
    %c0 = arith.constant 0 : index
    %c0_0 = arith.constant 0 : index
    %0 = vector.load %arg0[%c0, %c0_0] : memref<32x16xf32, #tpu.memory_space<vmem>>, vector<32x16xf32>
    %c0_1 = arith.constant 0 : index
    %c0_2 = arith.constant 0 : index
    %1 = vector.load %arg1[%c0_1, %c0_2] : memref<16x32xf32, #tpu.memory_space<vmem>>, vector<16x32xf32>
    %cst = arith.constant dense<0.000000e+00> : vector<32x32xf32>
    %2 = tpu.matmul %0, %1, %cst {dimension_numbers = #tpu.dot_dimension_numbers<[1], [0], [0], [1], [0, 0, 1, 1], [], []>} : vector<32x16xf32>, vector<16x32xf32>, vector<32x32xf32> -> vector<32x32xf32>
    %c0_3 = arith.constant 0 : index
    %c0_4 = arith.constant 0 : index
    %3 = vector.load %arg2[%c0_3, %c0_4] : memref<32x32xf32, #tpu.memory_space<vmem>>, vector<32x32xf32>
    tpu.vector_store %arg2[%c0_3, %c0_4], %2 {strides = array<i32>} : memref<32x32xf32, #tpu.memory_space<vmem>>, vector<32x32xf32>,
    return
  }
}

</mosaic_0001>

<llo_original>
// kernel: gcn_forward.2
$region0: #{gcn_forward.2}
  #allocation0 [shape = 'u32[]', space=smem, size = 0x4, offset = 0x4, fixed_abs, tag = 'smem constant byte address 0x4 - core index']
  #allocation1 [shape = 'u32[144,128]{1,0:T(1,128)}', space=vmem, size = 0x12000, scoped, tag = 'internal scratch']
  %s0 = inlined_call_operand.vmem [shape: f32[32,16], index: 0, kind: input, shape index: {}]
  %s1 = inlined_call_operand.hbm [shape: f32[16,32], index: 1, kind: input, shape index: {}]
  %s2 = inlined_call_operand.vmem [shape: f32[32,32], index: 2, kind: output, shape index: {}]
  %s3 = sld [smem:[#allocation0]]
  $region22: #{gcn_forward.2} parent=0
    _
  %s5 = ssub.s32 1, %s3
  %s6 = scalar_select 0, %s5, %s3
  $region1: #{gcn_forward.2} parent=0
    #allocation2 [shape = 'u8[8192]{0}', space=vmem, size = 0x2000, scoped, tag = 'input window, operand 1, single buffered']
    #allocation3 [shape = 's32[1]{0}', space=sflag, size = 0x4, scoped, tag = 'scoped memory for gcn_forward.2']
    %7 = vsyncpa [#allocation3], 0
    // Predicated region
    $region2: #{gcn_forward.2} parent=1 // pred_check
      _
    $region3: #{gcn_forward.2} parent=1 // pred_check_branch
      %9 = sbr.rel (0) target = $region5
    $region4: #{gcn_forward.2} parent=1 // pred_region
      _
    $region5: #{gcn_forward.2} parent=1 // pred_fallthru
      _
    // Predicated region
    $region6: #{gcn_forward.2} parent=1 // pred_check
      _
    $region7: #{gcn_forward.2} parent=1 // pred_check_branch
      %11 = sbr.rel (0) target = $region9
    $region8: #{gcn_forward.2} parent=1 // pred_region
      %s13 = ssub.s32 256, 256
      %14 = vsyncadd [#allocation3], %s13
      %s15 = sshll.u32 [#allocation2], 4
      %s16 = int_to_ptr.vmem [resolvable:$true] %s15
      %21 = dma.hbm_to_vmem [thread:$0]  %s1, 256, %s16, [#allocation3], 128, 128, 8
    $region9: #{gcn_forward.2} parent=1 // pred_fallthru
      _
    // Predicated region
    $region10: #{gcn_forward.2} parent=1 // pred_check
      _
    $region11: #{gcn_forward.2} parent=1 // pred_check_branch
      %23 = sbr.rel (0) target = $region13
    $region12: #{gcn_forward.2} parent=1 // pred_region
      %24 = dma.done [#allocation3], 256
    $region13: #{gcn_forward.2} parent=1 // pred_fallthru
      _
    %v25 = vld [vmem:[%s0] sm:$0xff]
    %v26 = vld [vmem:[%s0 + $0x8] sm:$0xff]
    %v27 = vld [vmem:[%s0 + $0x10] sm:$0xff]
    %v28 = vld [vmem:[%s0 + $0x18] sm:$0xff]
    %v29 = vld [vmem:[#allocation2] sm:$0xff]
    %v30 = vld [vmem:[#allocation2 + $0x8] sm:$0xff]
    %vm31 = vcmask 130048
    %v33 = vsel %vm31, %v25, 0
    %v36 = vsel %vm31, %v26, 0
    %v39 = vsel %vm31, %v27, 0
    %v42 = vsel %vm31, %v28, 0
    %44 = vmatprep.subr.mxu0 0.0
    %45 = vmatpush1.msra.mxu0 %v29
    %46 = vmatprep.subr.mxu0 0.0
    %47 = vmatpush1.msra.mxu0 %v30
    %48 = vmatprep.subr.mxu0 0.0
    %49 = vmatpush1.msra.mxu0 0.0
    %50 = vmatprep.subr.mxu0 0.0
    %51 = vmatpush1.msra.mxu0 0.0
    %52 = vmatprep.subr.mxu0 0.0
    %53 = vmatpush1.msra.mxu0 0.0
    %54 = vmatprep.subr.mxu0 0.0
    %55 = vmatpush1.msra.mxu0 0.0
    %56 = vmatprep.subr.mxu0 0.0
    %57 = vmatpush1.msra.mxu0 0.0
    %58 = vmatprep.subr.mxu0 0.0
    %59 = vmatpush1.msra.mxu0 0.0
    %60 = vmatprep.subr.mxu0 0.0
    %61 = vmatpush1.msra.mxu0 0.0
    %62 = vmatprep.subr.mxu0 0.0
    %63 = vmatpush1.msra.mxu0 0.0
    %64 = vmatprep.subr.mxu0 0.0
    %65 = vmatpush1.msra.mxu0 0.0
    %66 = vmatprep.subr.mxu0 0.0
    %67 = vmatpush1.msra.mxu0 0.0
    %68 = vmatprep.subr.mxu0 0.0
    %69 = vmatpush1.msra.mxu0 0.0
    %70 = vmatprep.subr.mxu0 0.0
    %71 = vmatpush1.msra.mxu0 0.0
    %72 = vmatprep.subr.mxu0 0.0
    %73 = vmatpush1.msra.mxu0 0.0
    %74 = vmatprep.subr.mxu0 0.0
    %75 = vmatpush1.msra.mxu0 0.0
    %76 = vmatprep.subr.mxu0 0.0
    %77 = vmatpush1.msra.mxu0 0.0
    %78 = vmatprep.subr.mxu0 0.0
    %79 = vmatpush1.msra.mxu0 0.0
    %80 = vmatprep.subr.mxu0 0.0
    %81 = vmatpush1.msra.mxu0 0.0
    %82 = vmatprep.subr.mxu0 0.0
    %83 = vmatpush1.msra.mxu0 0.0
    %84 = vmatprep.subr.mxu0 0.0
    %85 = vmatpush1.msra.mxu0 0.0
    %86 = vmatprep.subr.mxu0 0.0
    %87 = vmatpush1.msra.mxu0 0.0
    %88 = vmatprep.subr.mxu0 0.0
    %89 = vmatpush1.msra.mxu0 0.0
    %90 = vmatprep.subr.mxu0 0.0
    %91 = vmatpush1.msra.mxu0 0.0
    %92 = vmatprep.subr.mxu0 0.0
    %93 = vmatpush1.msra.mxu0 0.0
    %94 = vmatprep.subr.mxu0 0.0
    %95 = vmatpush1.msra.mxu0 0.0
    %96 = vmatprep.subr.mxu0 0.0
    %97 = vmatpush1.msra.mxu0 0.0
    %98 = vmatprep.subr.mxu0 0.0
    %99 = vmatpush1.msra.mxu0 0.0
    %100 = vmatprep.subr.mxu0 0.0
    %101 = vmatpush1.msra.mxu0 0.0
    %102 = vmatprep.subr.mxu0 0.0
    %103 = vmatpush1.msra.mxu0 0.0
    %104 = vmatprep.subr.mxu0 0.0
    %105 = vmatpush1.msra.mxu0 0.0
    %106 = vmatprep.subr.mxu0 0.0
    %107 = vmatpush1.msra.mxu0 0.0
    %108 = vmatprep.mubr.f32.mxu0 0.0
    %109 = vmatmul.mubr.f32.gmra.mrb[0].mxu0 %v33
    %v110 = vpop.f32.mrb[0].mxu0
    %v111 = vadd.f32 0.0, %v110
    %v112 = vpop.f32.mrb[0].mxu0
    %113 = vmatprep.mubr.f32.mxu0 0.0
    %114 = vmatmul.mubr.f32.gmra.mrb[0].mxu0 %v36
    %v115 = vpop.f32.mrb[0].mxu0
    %v116 = vadd.f32 0.0, %v115
    %v117 = vpop.f32.mrb[0].mxu0
    %118 = vmatprep.mubr.f32.mxu0 0.0
    %119 = vmatmul.mubr.f32.gmra.mrb[0].mxu0 %v39
    %v120 = vpop.f32.mrb[0].mxu0
    %v121 = vadd.f32 0.0, %v120
    %v122 = vpop.f32.mrb[0].mxu0
    %123 = vmatprep.mubr.f32.mxu0 0.0
    %124 = vmatmul.mubr.f32.gmra.mrb[0].mxu0 %v42
    %v125 = vpop.f32.mrb[0].mxu0
    %v126 = vadd.f32 0.0, %v125
    %v127 = vpop.f32.mrb[0].mxu0
    %128 = vdwg.mxu0
    %vm129 = vcmask 261120
    %130 = vst.msk [vmem:[%s2] sm:$0xff] %vm129, %v111
    %131 = vst.msk [vmem:[%s2 + $0x8] sm:$0xff] %vm129, %v116
    %132 = vst.msk [vmem:[%s2 + $0x10] sm:$0xff] %vm129, %v121
    %133 = vst.msk [vmem:[%s2 + $0x18] sm:$0xff] %vm129, %v126
    // Predicated region
    $region14: #{gcn_forward.2} parent=1 // pred_check
      _
    $region15: #{gcn_forward.2} parent=1 // pred_check_branch
      %135 = sbr.rel (0) target = $region17
    $region16: #{gcn_forward.2} parent=1 // pred_region
      _
    $region17: #{gcn_forward.2} parent=1 // pred_fallthru
      _
    // Predicated region
    $region18: #{gcn_forward.2} parent=1 // pred_check
      _
    $region19: #{gcn_forward.2} parent=1 // pred_check_branch
      %137 = sbr.rel (0) target = $region21
    $region20: #{gcn_forward.2} parent=1 // pred_region
      _
    $region21: #{gcn_forward.2} parent=1 // pred_fallthru
      _
    %138 = vsyncpa [#allocation3], 1

// kernel: gcn_forward.3
$region0: #{gcn_forward.3}
  #allocation0 [shape = 'u32[]', space=smem, size = 0x4, offset = 0x4, fixed_abs, tag = 'smem constant byte address 0x4 - core index']
  #allocation1 [shape = 'u32[144,128]{1,0:T(1,128)}', space=vmem, size = 0x12000, scoped, tag = 'internal scratch']
  %s0 = inlined_call_operand.vmem [shape: f32[4], index: 0, kind: input, shape index: {}]
  %s1 = inlined_call_operand.vmem [shape: f32[4,32,32], index: 1, kind: input, shape index: {}]
  %s2 = inlined_call_operand.vmem [shape: f32[32,32], index: 2, kind: input, shape index: {}]
  %s3 = inlined_call_operand.vmem [shape: f32[1,32], index: 3, kind: input, shape index: {}]
  %s4 = inlined_call_operand.hbm [shape: f32[32,32], index: 4, kind: output, shape index: {}]
  %s5 = sld [smem:[#allocation0]]
  $region91: #{gcn_forward.3} parent=0
    _
  %s7 = ssub.s32 1, %s5
  %s8 = scalar_select 0, %s7, %s5
  $region1: #{gcn_forward.3} parent=0
    #allocation2 [shape = 'u8[512]{0}', space=smem, size = 0x200, scoped, tag = 'input window, operand 0, single buffered']
    #allocation3 [shape = 's32[2]{0}', space=sflag, size = 0x8, scoped, tag = 'scoped memory for gcn_forward.3']
    #allocation4 [shape = 's32[2]{0}', space=sflag, size = 0x8, scoped, tag = 'scoped memory for gcn_forward.3']
    #allocation5 [shape = 'u8[32768]{0}', space=vmem, size = 0x8000, scoped, tag = 'input window, operand 1']
    #allocation6 [shape = 'u8[8192]{0}', space=vmem, size = 0x2000, scoped, tag = 'output window, operand 0']
    %9 = vsyncpa [#allocation4], 0
    %10 = vsyncpa [#allocation3], 0
    %s11 = scalar_lea.sflag [#allocation3], 1
    %12 = vsyncpa %s11, 0
    loop: start=0, step=1, limit=6
    $region2: #{gcn_forward.3} parent=1 // loop_pre_header
      _
    $region3: #{gcn_forward.3} parent=1 // loop_header
      %s14 = sphi 0, %s18
      %p15 = scmp.ge.s32.totalorder %s14, 6
      %s22 = sphi 0, %s22
      %s24 = sphi 0, %s22
      %s25 = sphi 0, %s24
      %s39 = sphi 0, %s25
      %s45 = sphi 0, %s47
      %s48 = sphi 0, %s45
      %s49 = sphi 0, %s48
      %s65 = sphi 0, %s49
      %s69 = sphi 0, %s69
      %s71 = sphi 0, %s69
      %s72 = sphi 0, %s71
      %s86 = sphi 0, %s72
      %s90 = sphi 0, %s90
      %s92 = sphi 0, %s90
      %s93 = sphi 0, %s92
      %s107 = sphi 0, %s93
      %s113 = sphi 0, %s115
      %s116 = sphi 0, %s113
      %s117 = sphi 0, %s116
      %s133 = sphi 0, %s117
    $region4: #{gcn_forward.3} parent=1 // loop_header_branch
      %17 = sbr.rel (%p15) target = $region8
    $region5: #{gcn_forward.3} parent=1 // loop_body
      %s19 = ssub.s32 %s14, 1
      %s20 = ssub.s32 %s14, 2
      %s21 = sadd.s32 %s14, 1
      %s23 = sadd.s32 %s22, 1
      %p26 = scmp.eq.s32.totalorder %s14, 3
      %p27 = scmp.ne.s32.totalorder %s22, %s24
      %p28 = scmp.eq.s32.totalorder %s14, 0
      %p29 = por %p27, %p28
      %p30 = scmp.ne.s32.totalorder %s22, %s24
      %p31 = scmp.eq.s32.totalorder %s19, 3
      %p32 = por %p30, %p31
      %p33 = scmp.ne.s32.totalorder %s24, %s25
      %p34 = scmp.eq.s32.totalorder %s19, 0
      %p35 = por %p33, %p34
      %p36 = scmp.ne.s32.totalorder %s24, %s25
      %p37 = scmp.eq.s32.totalorder %s20, 3
      %p38 = por %p36, %p37
      %p40 = scmp.ne.s32.totalorder %s25, %s39
      %p41 = scmp.eq.s32.totalorder %s20, 0
      %p42 = por %p40, %p41
      %s43 = ssub.s32 %s14, %s21
      %p44 = scmp.eq.s32.totalorder %s43, 0
      %s46 = sadd.s32 %s45, 1
      %s47 = scalar_select %p44, %s45, %s46
      %p50 = pneg %p44
      %p51 = scmp.eq.s32.totalorder %s14, 3
      %p52 = por %p50, %p51
      %p53 = scmp.ne.s32.totalorder %s45, %s48
      %p54 = scmp.eq.s32.totalorder %s14, 0
      %p55 = por %p53, %p54
      %p56 = scmp.ne.s32.totalorder %s45, %s48
      %p57 = scmp.eq.s32.totalorder %s19, 3
      %p58 = por %p56, %p57
      %p59 = scmp.ne.s32.totalorder %s48, %s49
      %p60 = scmp.eq.s32.totalorder %s19, 0
      %p61 = por %p59, %p60
      %p62 = scmp.ne.s32.totalorder %s48, %s49
      %p63 = scmp.eq.s32.totalorder %s20, 3
      %p64 = por %p62, %p63
      %p66 = scmp.ne.s32.totalorder %s49, %s65
      %p67 = scmp.eq.s32.totalorder %s20, 0
      %p68 = por %p66, %p67
      %s70 = sadd.s32 %s69, 1
      %p73 = scmp.eq.s32.totalorder %s14, 3
      %p74 = scmp.ne.s32.totalorder %s69, %s71
      %p75 = scmp.eq.s32.totalorder %s14, 0
      %p76 = por %p74, %p75
      %p77 = scmp.ne.s32.totalorder %s69, %s71
      %p78 = scmp.eq.s32.totalorder %s19, 3
      %p79 = por %p77, %p78
      %p80 = scmp.ne.s32.totalorder %s71, %s72
      %p81 = scmp.eq.s32.totalorder %s19, 0
      %p82 = por %p80, %p81
      %p83 = scmp.ne.s32.totalorder %s71, %s72
      %p84 = scmp.eq.s32.totalorder %s20, 3
      %p85 = por %p83, %p84
      %p87 = scmp.ne.s32.totalorder %s72, %s86
      %p88 = scmp.eq.s32.totalorder %s20, 0
      %p89 = por %p87, %p88
      %s91 = sadd.s32 %s90, 1
      %p94 = scmp.eq.s32.totalorder %s14, 3
      %p95 = scmp.ne.s32.totalorder %s90, %s92
      %p96 = scmp.eq.s32.totalorder %s14, 0
      %p97 = por %p95, %p96
      %p98 = scmp.ne.s32.totalorder %s90, %s92
      %p99 = scmp.eq.s32.totalorder %s19, 3
      %p100 = por %p98, %p99
      %p101 = scmp.ne.s32.totalorder %s92, %s93
      %p102 = scmp.eq.s32.totalorder %s19, 0
      %p103 = por %p101, %p102
      %p104 = scmp.ne.s32.totalorder %s92, %s93
      %p105 = scmp.eq.s32.totalorder %s20, 3
      %p106 = por %p104, %p105
      %p108 = scmp.ne.s32.totalorder %s93, %s107
      %p109 = scmp.eq.s32.totalorder %s20, 0
      %p110 = por %p108, %p109
      %s111 = ssub.s32 %s14, %s21
      %p112 = scmp.eq.s32.totalorder %s111, 0
      %s114 = sadd.s32 %s113, 1
      %s115 = scalar_select %p112, %s113, %s114
      %p118 = pneg %p112
      %p119 = scmp.eq.s32.totalorder %s14, 3
      %p120 = por %p118, %p119
      %p121 = scmp.ne.s32.totalorder %s113, %s116
      %p122 = scmp.eq.s32.totalorder %s14, 0
      %p123 = por %p121, %p122
      %p124 = scmp.ne.s32.totalorder %s113, %s116
      %p125 = scmp.eq.s32.totalorder %s19, 3
      %p126 = por %p124, %p125
      %p127 = scmp.ne.s32.totalorder %s116, %s117
      %p128 = scmp.eq.s32.totalorder %s19, 0
      %p129 = por %p127, %p128
      %p130 = scmp.ne.s32.totalorder %s116, %s117
      %p131 = scmp.eq.s32.totalorder %s20, 3
      %p132 = por %p130, %p131
      %p134 = scmp.ne.s32.totalorder %s117, %s133
      %p135 = scmp.eq.s32.totalorder %s20, 0
      %p136 = por %p134, %p135
      %p137 = scmp.le.s32.totalorder 1, %s14
      %p138 = scmp.lt.s32.totalorder %s14, 5
      %p139 = pnand %p137, %p138
      %p140 = pneg %p139
      // Predicated region
      $region9: #{gcn_forward.3} parent=5 // pred_check
        _
      $region10: #{gcn_forward.3} parent=5 // pred_check_branch
        %142 = sbr.rel (%p139) target = $region12
      $region11: #{gcn_forward.3} parent=5 // pred_region
        %s143 = ssub.s32 %s14, 1
        // Predicated region
        $region13: #{gcn_forward.3} parent=11 // pred_check
          %p144 = pneg %p35
        $region14: #{gcn_forward.3} parent=11 // pred_check_branch
          %146 = sbr.rel (%p144) target = $region16
        $region15: #{gcn_forward.3} parent=11 // pred_region
          %s148 = ssub.s32 16, 16
          %149 = vsyncadd [#allocation4], %s148
          %s151 = sshll.u32 %s0, 4
          %s152 = int_to_ptr.vmem [resolvable:$true] %s151
          %154 = dma.vmem_to_smem %s152, 16, [#allocation2], [#allocation4]
        $region16: #{gcn_forward.3} parent=11 // pred_fallthru
          _
        // Predicated region
        $region17: #{gcn_forward.3} parent=11 // pred_check
          %p155 = pneg %p82
        $region18: #{gcn_forward.3} parent=11 // pred_check_branch
          %157 = sbr.rel (%p155) target = $region20
        $region19: #{gcn_forward.3} parent=11 // pred_region
          _
        $region20: #{gcn_forward.3} parent=11 // pred_fallthru
          _
        // Predicated region
        $region21: #{gcn_forward.3} parent=11 // pred_check
          %p158 = pneg %p103
        $region22: #{gcn_forward.3} parent=11 // pred_check_branch
          %160 = sbr.rel (%p158) target = $region24
        $region23: #{gcn_forward.3} parent=11 // pred_region
          _
        $region24: #{gcn_forward.3} parent=11 // pred_fallthru
          _
      $region12: #{gcn_forward.3} parent=5 // pred_fallthru
        _
      %p161 = scmp.lt.s32.totalorder %s14, 4
      // Predicated region
      $region25: #{gcn_forward.3} parent=5 // pred_check
        %p162 = pneg %p161
      $region26: #{gcn_forward.3} parent=5 // pred_check_branch
        %164 = sbr.rel (%p162) target = $region28
      $region27: #{gcn_forward.3} parent=5 // pred_region
        // Predicated region
        $region29: #{gcn_forward.3} parent=27 // pred_check
          %p165 = pneg %p55
        $region30: #{gcn_forward.3} parent=27 // pred_check_branch
          %167 = sbr.rel (%p165) target = $region32
        $region31: #{gcn_forward.3} parent=27 // pred_region
          %s168 = sand.u32 %s45, 1
          %s169 = sand.u32 %s45, 1
          %s170 = smul.addr %s169, 32
          %s171 = scalar_lea.vmem [#allocation5], %s170
          %s172 = smul.addr %s14, 8
          %s173 = scalar_lea.vmem %s1, %s172
          // Predicated region
          $region33: #{gcn_forward.3} parent=31 // pred_check
            _
          $region34: #{gcn_forward.3} parent=31 // pred_check_branch
            %175 = sbr.rel (0) target = $region36
          $region35: #{gcn_forward.3} parent=31 // pred_region
            // Predicated region
            $region37: #{gcn_forward.3} parent=35 // pred_check
              _
            $region38: #{gcn_forward.3} parent=35 // pred_check_branch
              %177 = sbr.rel (0) target = $region40
            $region39: #{gcn_forward.3} parent=35 // pred_region
              // Predicated region
              $region52: #{gcn_forward.3} parent=39 // pred_check
                _
              $region53: #{gcn_forward.3} parent=39 // pred_check_branch
                %198 = sbr.rel (0) target = $region55
              $region54: #{gcn_forward.3} parent=39 // pred_region
                loop: start=0, step=1, limit=1
                $region56: #{gcn_forward.3} parent=54 // loop_pre_header
                  _
                $region57: #{gcn_forward.3} parent=54 // loop_header
                  %s200 = sphi 0, %s204
                  %p201 = scmp.ge.s32.totalorder %s200, 1
                  %s205 = sphi %s173, %s173
                  %s206 = sphi %s171, %s171
                $region58: #{gcn_forward.3} parent=54 // loop_header_branch
                  %203 = sbr.rel (%p201) target = $region62
                $region59: #{gcn_forward.3} parent=54 // loop_body
                  %v207 = vld [vmem:[%s205] sm:$0xff]
                  %208 = vst [vmem:[%s206] sm:$0xff] %v207
                  %v209 = vld [vmem:[%s205 + $0x20] sm:$0xff]
                  %210 = vst [vmem:[%s206 + $0x8] sm:$0xff] %v209
                  %v211 = vld [vmem:[%s205 + $0x40] sm:$0xff]
                  %212 = vst [vmem:[%s206 + $0x10] sm:$0xff] %v211
                  %v213 = vld [vmem:[%s205 + $0x60] sm:$0xff]
                  %214 = vst [vmem:[%s206 + $0x18] sm:$0xff] %v213
                $region60: #{gcn_forward.3} parent=54 // loop_footer
                  %s204 = sadd.s32 1, %s200
                $region61: #{gcn_forward.3} parent=54 // loop_footer_branch
                  %199 = sbr.rel target = $region57
                $region62: #{gcn_forward.3} parent=54 // loop_exit
                  _
              $region55: #{gcn_forward.3} parent=39 // pred_fallthru
                _
              // Predicated region
              $region63: #{gcn_forward.3} parent=39 // pred_check
                _
              $region64: #{gcn_forward.3} parent=39 // pred_check_branch
                %216 = sbr.rel target = $region66
              $region65: #{gcn_forward.3} parent=39 // pred_region
                _
              $region66: #{gcn_forward.3} parent=39 // pred_fallthru
                _
            $region40: #{gcn_forward.3} parent=35 // pred_fallthru
              _
            // Predicated region
            $region41: #{gcn_forward.3} parent=35 // pred_check
              _
            $region42: #{gcn_forward.3} parent=35 // pred_check_branch
              %179 = sbr.rel target = $region44
            $region43: #{gcn_forward.3} parent=35 // pred_region
              loop: start=0, step=1, limit=1
              $region45: #{gcn_forward.3} parent=43 // loop_pre_header
                _
              $region46: #{gcn_forward.3} parent=43 // loop_header
                %s182 = sphi 0, %s186
                %p183 = scmp.ge.s32.totalorder %s182, 1
                %s187 = sphi %s173, %s173
                %s188 = sphi %s171, %s171
              $region47: #{gcn_forward.3} parent=43 // loop_header_branch
                %185 = sbr.rel (%p183) target = $region51
              $region48: #{gcn_forward.3} parent=43 // loop_body
                %v189 = vld [vmem:[%s187] sm:$0xff]
                %190 = vst [vmem:[%s188] sm:$0xff] %v189
                %v191 = vld [vmem:[%s187 + $0x20] sm:$0xff]
                %192 = vst [vmem:[%s188 + $0x8] sm:$0xff] %v191
                %v193 = vld [vmem:[%s187 + $0x40] sm:$0xff]
                %194 = vst [vmem:[%s188 + $0x10] sm:$0xff] %v193
                %v195 = vld [vmem:[%s187 + $0x60] sm:$0xff]
                %196 = vst [vmem:[%s188 + $0x18] sm:$0xff] %v195
              $region49: #{gcn_forward.3} parent=43 // loop_footer
                %s186 = sadd.s32 1, %s182
              $region50: #{gcn_forward.3} parent=43 // loop_footer_branch
                %181 = sbr.rel target = $region46
              $region51: #{gcn_forward.3} parent=43 // loop_exit
                _
            $region44: #{gcn_forward.3} parent=35 // pred_fallthru
              _
          $region36: #{gcn_forward.3} parent=31 // pred_fallthru
            _
          %217 = vnop
        $region32: #{gcn_forward.3} parent=27 // pred_fallthru
          _
      $region28: #{gcn_forward.3} parent=5 // pred_fallthru
        _
      %p218 = scmp.le.s32.totalorder 1, %s14
      %p219 = scmp.lt.s32.totalorder %s14, 5
      %p220 = pnand %p218, %p219
      %p221 = pneg %p220
      // Predicated region
      $region67: #{gcn_forward.3} parent=5 // pred_check
        _
      $region68: #{gcn_forward.3} parent=5 // pred_check_branch
        %223 = sbr.rel (%p220) target = $region70
      $region69: #{gcn_forward.3} parent=5 // pred_region
        %s224 = ssub.s32 %s14, 1
        // Predicated region
        $region71: #{gcn_forward.3} parent=69 // pred_check
          %p225 = pneg %p35
        $region72: #{gcn_forward.3} parent=69 // pred_check_branch
          %227 = sbr.rel (%p225) target = $region74
        $region73: #{gcn_forward.3} parent=69 // pred_region
          %228 = dma.done [#allocation4], 16
        $region74: #{gcn_forward.3} parent=69 // pred_fallthru
          _
        %s229 = sand.u32 %s48, 1
        %s230 = sand.u32 %s48, 1
        %s231 = smul.addr %s230, 32
        %s232 = scalar_lea.vmem [#allocation5], %s231
        // Predicated region
        $region75: #{gcn_forward.3} parent=69 // pred_check
          %p233 = pneg %p61
        $region76: #{gcn_forward.3} parent=69 // pred_check_branch
          %235 = sbr.rel (%p233) target = $region78
        $region77: #{gcn_forward.3} parent=69 // pred_region
          _
        $region78: #{gcn_forward.3} parent=69 // pred_fallthru
          _
        %236 = sfence
        %p237 = pneg %p35
        %p238 = pneg %p32
        %s239 = sand.u32 %s48, 1
        %s240 = sand.u32 %s48, 1
        %s241 = smul.addr %s240, 32
        %s242 = scalar_lea.vmem [#allocation5], %s241
        %p243 = pneg %p61
        %p244 = pneg %p58
        %p245 = pneg %p82
        %p246 = pneg %p79
        %p247 = pneg %p103
        %p248 = pneg %p100
        %p249 = pneg %p129
        %p250 = pneg %p126
        %s251 = sand.u32 %s116, 1
        %s252 = scalar_lea.sflag [#allocation3], %s251
        %s253 = sand.u32 %s116, 1
        %s254 = smul.addr %s253, 8
        %s255 = scalar_lea.vmem [#allocation6], %s254
        %s256 = sld [smem:[#allocation2]]
        %v257 = vld [vmem:[%s232] sm:$0xff]
        %v258 = vstv %s256
        %v259 = vmul.f32 %v258, %v257
        %s260 = sld [smem:[#allocation2 + $0x1]]
        %s261 = scalar_lea.vmem %s232, 8 [#allocation5]
        %v262 = vld [vmem:[%s261] sm:$0xff]
        %v263 = vstv %s260
        %v264 = vmul.f32 %v263, %v262
        %v265 = vadd.f32 %v259, %v264
        %s266 = sld [smem:[#allocation2 + $0x2]]
        %s267 = scalar_lea.vmem %s232, 16 [#allocation5]
        %v268 = vld [vmem:[%s267] sm:$0xff]
        %v269 = vstv %s266
        %v270 = vmul.f32 %v269, %v268
        %v271 = vadd.f32 %v265, %v270
        %s272 = sld [smem:[#allocation2 + $0x3]]
        %s273 = scalar_lea.vmem %s232, 24 [#allocation5]
        %v274 = vld [vmem:[%s273] sm:$0xff]
        %v275 = vstv %s272
        %v276 = vmul.f32 %v275, %v274
        %v277 = vadd.f32 %v271, %v276
        %v278 = vld [vmem:[%s2] sm:$0xff]
        %v279 = vld [vmem:[%s2 + $0x8] sm:$0xff]
        %v280 = vld [vmem:[%s2 + $0x10] sm:$0xff]
        %v281 = vld [vmem:[%s2 + $0x18] sm:$0xff]
        %v282 = vld [vmem:[%s3] sm:$0x1]
        %v284 = vlaneseq
        %v285 = vshrl.u32 %v284, 7
        %v286 = vsub.s32 0, %v285
        %v287 = vrot.slane %v282, %v286
        %vm289 = vcmask 261120
        %v291 = vsel %vm289, %v277, 0
        %293 = vmatprep.subr.mxu0 0.0
        %294 = vmatpush1.msra.mxu0 %v278
        %295 = vmatprep.subr.mxu0 0.0
        %296 = vmatpush1.msra.mxu0 %v279
        %297 = vmatprep.subr.mxu0 0.0
        %298 = vmatpush1.msra.mxu0 %v280
        %299 = vmatprep.subr.mxu0 0.0
        %300 = vmatpush1.msra.mxu0 %v281
        %301 = vmatprep.subr.mxu0 0.0
        %302 = vmatpush1.msra.mxu0 0.0
        %303 = vmatprep.subr.mxu0 0.0
        %304 = vmatpush1.msra.mxu0 0.0
        %305 = vmatprep.subr.mxu0 0.0
        %306 = vmatpush1.msra.mxu0 0.0
        %307 = vmatprep.subr.mxu0 0.0
        %308 = vmatpush1.msra.mxu0 0.0
        %309 = vmatprep.subr.mxu0 0.0
        %310 = vmatpush1.msra.mxu0 0.0
        %311 = vmatprep.subr.mxu0 0.0
        %312 = vmatpush1.msra.mxu0 0.0
        %313 = vmatprep.subr.mxu0 0.0
        %314 = vmatpush1.msra.mxu0 0.0
        %315 = vmatprep.subr.mxu0 0.0
        %316 = vmatpush1.msra.mxu0 0.0
        %317 = vmatprep.subr.mxu0 0.0
        %318 = vmatpush1.msra.mxu0 0.0
        %319 = vmatprep.subr.mxu0 0.0
        %320 = vmatpush1.msra.mxu0 0.0
        %321 = vmatprep.subr.mxu0 0.0
        %322 = vmatpush1.msra.mxu0 0.0
        %323 = vmatprep.subr.mxu0 0.0
        %324 = vmatpush1.msra.mxu0 0.0
        %325 = vmatprep.subr.mxu0 0.0
        %326 = vmatpush1.msra.mxu0 0.0
        %327 = vmatprep.subr.mxu0 0.0
        %328 = vmatpush1.msra.mxu0 0.0
        %329 = vmatprep.subr.mxu0 0.0
        %330 = vmatpush1.msra.mxu0 0.0
        %331 = vmatprep.subr.mxu0 0.0
        %332 = vmatpush1.msra.mxu0 0.0
        %333 = vmatprep.subr.mxu0 0.0
        %334 = vmatpush1.msra.mxu0 0.0
        %335 = vmatprep.subr.mxu0 0.0
        %336 = vmatpush1.msra.mxu0 0.0
        %337 = vmatprep.subr.mxu0 0.0
        %338 = vmatpush1.msra.mxu0 0.0
        %339 = vmatprep.subr.mxu0 0.0
        %340 = vmatpush1.msra.mxu0 0.0
        %341 = vmatprep.subr.mxu0 0.0
        %342 = vmatpush1.msra.mxu0 0.0
        %343 = vmatprep.subr.mxu0 0.0
        %344 = vmatpush1.msra.mxu0 0.0
        %345 = vmatprep.subr.mxu0 0.0
        %346 = vmatpush1.msra.mxu0 0.0
        %347 = vmatprep.subr.mxu0 0.0
        %348 = vmatpush1.msra.mxu0 0.0
        %349 = vmatprep.subr.mxu0 0.0
        %350 = vmatpush1.msra.mxu0 0.0
        %351 = vmatprep.subr.mxu0 0.0
        %352 = vmatpush1.msra.mxu0 0.0
        %353 = vmatprep.subr.mxu0 0.0
        %354 = vmatpush1.msra.mxu0 0.0
        %355 = vmatprep.subr.mxu0 0.0
        %356 = vmatpush1.msra.mxu0 0.0
        %357 = vmatprep.mubr.f32.mxu0 0.0
        %358 = vmatmul.mubr.f32.gmra.mrb[0].mxu0 %v291
        %v359 = vpop.f32.mrb[0].mxu0
        %v360 = vadd.f32 %v287, %v359
        %v361 = vpop.f32.mrb[0].mxu0
        %362 = vdwg.mxu0
        %363 = vst.msk [vmem:[%s255] sm:$0xff] %vm289, %v360
        %s364 = sand.u32 %s116, 1
        %s365 = scalar_lea.sflag [#allocation3], %s364
        %s366 = sand.u32 %s116, 1
        %s367 = smul.addr %s366, 8
        %s368 = scalar_lea.vmem [#allocation6], %s367
        // Predicated region
        $region79: #{gcn_forward.3} parent=69 // pred_check
          %p369 = pneg %p126
        $region80: #{gcn_forward.3} parent=69 // pred_check_branch
          %371 = sbr.rel (%p369) target = $region82
        $region81: #{gcn_forward.3} parent=69 // pred_region
          %s373 = ssub.s32 128, 128
          %374 = vsyncadd %s365, %s373
          %s375 = smul.addr %s19, 128
          %s376 = scalar_lea.hbm %s4, %s375
          %s378 = sshll.u32 %s368, 4
          %s379 = int_to_ptr.vmem [resolvable:$true] %s378
          %381 = dma.vmem_to_hbm [thread:$0]  %s379, 128, %s376, %s365
        $region82: #{gcn_forward.3} parent=69 // pred_fallthru
          _
      $region70: #{gcn_forward.3} parent=5 // pred_fallthru
        _
      %p382 = scmp.le.s32.totalorder 2, %s14
      // Predicated region
      $region83: #{gcn_forward.3} parent=5 // pred_check
        %p383 = pneg %p382
      $region84: #{gcn_forward.3} parent=5 // pred_check_branch
        %385 = sbr.rel (%p383) target = $region86
      $region85: #{gcn_forward.3} parent=5 // pred_region
        %s386 = ssub.s32 %s14, 2
        // Predicated region
        $region87: #{gcn_forward.3} parent=85 // pred_check
          %p387 = pneg %p132
        $region88: #{gcn_forward.3} parent=85 // pred_check_branch
          %389 = sbr.rel (%p387) target = $region90
        $region89: #{gcn_forward.3} parent=85 // pred_region
          %s390 = sand.u32 %s117, 1
          %s391 = scalar_lea.sflag [#allocation3], %s390
          %s392 = sand.u32 %s117, 1
          %s393 = smul.addr %s392, 8
          %s394 = scalar_lea.vmem [#allocation6], %s393
          %395 = dma.done %s391, 128
        $region90: #{gcn_forward.3} parent=85 // pred_fallthru
          _
      $region86: #{gcn_forward.3} parent=5 // pred_fallthru
        _
    $region6: #{gcn_forward.3} parent=1 // loop_footer
      %s18 = sadd.s32 1, %s14
    $region7: #{gcn_forward.3} parent=1 // loop_footer_branch
      %13 = sbr.rel target = $region3
    $region8: #{gcn_forward.3} parent=1 // loop_exit
      _
    %396 = vsyncpa [#allocation3], 1
    %s397 = scalar_lea.sflag [#allocation3], 1
    %398 = vsyncpa %s397, 1
    %399 = vsyncpa [#allocation4], 1
    %s400 = scalar_lea.sflag [#allocation4], 1
    %401 = vsyncpa %s400, 1

</llo_original>
